<compile_context>
chip_gen: v5e
topology: v5e:2x2
jax: 0.10.0
libtpu: 0.0.40
codegen_flags: <defaults>
</compile_context>

<pallas_src>
import math

import jax
import jax.numpy as jnp
from jax.experimental import pallas as pl
from jax.experimental.pallas import tpu as pltpu


def _round_up(v, m):
    return (v + m - 1) // m * m


# ---------------------------------------------------------------------------
# Kernel
# ---------------------------------------------------------------------------
def _pool_proj_bn_relu_kernel(f_ref, p_ref, w_ref, b_ref, adapted_ref, feat_ref):
    # f_ref:       [TB, C*HW]  flattened NCHW feature tile (C*HW on lanes)
    # p_ref:       [C*HW, C]   block-averaging matrix (1/HW on block diagonal)
    # w_ref:       [C, OUT_P]  BN-folded projection weight (VMEM resident)
    # b_ref:       [1, OUT_P]  BN-folded bias              (VMEM resident)
    # adapted_ref: [TB, OUT_P] lane-dense output (OUT_P % 128 == 0)
    # feat_ref:    [TB, C]     pooled features (second module output)
    f = f_ref[...]
    # Global average pool as an MXU matmul: avoids reshaping the flat tile
    # (which would cross (8,128) layout tiles) and keeps the reduction off
    # masked lanes.  MXU is essentially idle in this memory-bound kernel.
    pooled = jnp.dot(f.astype(jnp.float32), p_ref[...],
                     preferred_element_type=jnp.float32)            # [TB, C]
    feat_ref[...] = pooled.astype(feat_ref.dtype)
    y = jnp.dot(pooled.astype(w_ref.dtype), w_ref[...],
                preferred_element_type=jnp.float32)                 # [TB, OUT_P]
    y = y + b_ref[...].astype(jnp.float32)                          # f32 epilogue (v5e-safe)
    adapted_ref[...] = jnp.maximum(y, 0.0).astype(adapted_ref.dtype)


# ---------------------------------------------------------------------------
# One-time parameter preparation (hoisted out of the per-forward path)
# ---------------------------------------------------------------------------
def prepare_projection_params(weight, bias, gamma, beta, running_mean, running_var,
                              eps=1e-5, compute_dtype=jnp.float32):
    """Fold eval-mode BatchNorm1d into nn.Linear, transpose to [IN, OUT] and
    pad OUT up to a multiple of 128 (lane-dense, unmasked output stores).

    weight: [out_features, in_features] (PyTorch nn.Linear layout).
    Pass compute_dtype=jnp.bfloat16 to halve the resident weight footprint
    (MXU takes bf16 on v5e/v6e/v7x; accumulation stays f32).
    Returns (w_folded [IN, OUT_P], b_folded [1, OUT_P], out_features).
    """
    out_features = weight.shape[0]
    scale = gamma / jnp.sqrt(running_var + eps)                      # [OUT]
    shift = beta - running_mean * scale                              # [OUT]
    w_folded = (weight.T * scale[None, :]).astype(compute_dtype)     # [IN, OUT]
    b_folded = (bias * scale + shift).astype(jnp.float32)            # [OUT]
    out_p = _round_up(out_features, 128)
    if out_p != out_features:
        w_folded = jnp.pad(w_folded, ((0, 0), (0, out_p - out_features)))
        b_folded = jnp.pad(b_folded, (0, out_p - out_features))
    return w_folded, b_folded.reshape(1, out_p), out_features


def _make_pool_matrix(c, hw, dtype=jnp.float32):
    # P[i, k] = 1/HW if i // HW == k else 0  ->  flat_NCHW @ P == spatial mean.
    ch = jnp.arange(c * hw, dtype=jnp.int32) // hw
    eye = (ch[:, None] == jnp.arange(c, dtype=jnp.int32)[None, :]).astype(dtype)
    return eye / float(hw)


# ---------------------------------------------------------------------------
# VMEM budgeting / batch-tile picker
# ---------------------------------------------------------------------------
def _vmem_capacity_bytes():
    try:
        return int(pltpu.get_tpu_info().vmem_capacity_bytes)
    except Exception:
        return 64 * 1024 * 1024   # conservative fallback: v7x per-TC physical VMEM


def _per_step_vmem_bytes(tb, c, chw, out_p, f_item, w_item, out_item):
    """Mosaic-PADDED VMEM footprint of one grid step (everything x2 buffers)."""
    sl, lane = 8, 128
    f_tile = _round_up(tb, sl) * _round_up(chw, lane) * f_item          # feature tile
    p_mat = _round_up(chw, sl) * _round_up(c, lane) * 4                 # pooling matrix (f32)
    w_mat = _round_up(c, sl) * out_p * w_item                           # folded weight
    b_vec = sl * out_p * 4                                              # folded bias
    o_adapt = _round_up(tb, sl) * out_p * out_item
    o_feat = _round_up(tb, sl) * _round_up(c, lane) * out_item
    return 2 * (f_tile + p_mat + w_mat + b_vec + o_adapt + o_feat)


def _pick_batch_tile(batch, c, chw, out_p, f_item, w_item, out_item, budget):
    fixed = _per_step_vmem_bytes(0, c, chw, out_p, f_item, w_item, out_item)
    per_row = max(
        (_per_step_vmem_bytes(8, c, chw, out_p, f_item, w_item, out_item) - fixed) // 8, 1)
    avail = max(budget - fixed, 0)
    tb = max(8, (avail // per_row) // 8 * 8)
    tb = min(tb, 2048)
    # Keep >= ~4 grid steps for large batches so the "parallel" axis can shard
    # across v7x's two TensorCores and DMA/compute overlap exists.
    if batch >= 32:
        tb = min(tb, max(8, _round_up(pl.cdiv(batch, 4), 8)))
    if tb >= batch:
        return batch                      # single full-batch block (any B allowed)
    return tb


# ---------------------------------------------------------------------------
# Forward
# ---------------------------------------------------------------------------
def enhanced_feature_extractor_forward(features, proj_params=None, *,
                                       trim_padded_output=True):
    """EnhancedFeatureExtractor.forward given the backbone output `features`.

    features:    [B, C, H, W] NCHW feature map (or already-flat [B, C]).
                 Stream bf16 when the backbone precision allows — the kernel
                 is HBM-bandwidth bound; accumulation stays f32.
    proj_params: result of prepare_projection_params, or None for the
                 Identity-adapter branch (actual_dim == target_dim, where the
                 torch module applies no projection/BN/activation/dropout).
    Returns (adapted_features [B, target_dim], pooled_features [B, C]).
    """
    if features.ndim > 2:
        b, c = features.shape[0], features.shape[1]
        hw = math.prod(features.shape[2:])
    else:
        b, c = features.shape
        hw = 1
    chw = c * hw
    # Free view of contiguous NCHW: keeps the full C*HW extent on the lane axis
    # (no HW<128 minor-dim padding / masked loads inside the kernel).
    flat = features.reshape(b, chw)

    if proj_params is None:
        # Identity adapter branch: module returns the pooled features unchanged.
        pooled = jnp.mean(features.reshape(b, c, hw), axis=-1) if hw > 1 else flat
        return pooled, pooled

    w_folded, b_folded, out_features = proj_params
    out_p = w_folded.shape[1]
    out_dtype = features.dtype

    pool_mat = _make_pool_matrix(c, hw, jnp.float32)

    f_item = features.dtype.itemsize
    w_item = w_folded.dtype.itemsize
    o_item = jnp.dtype(out_dtype).itemsize
    capacity = _vmem_capacity_bytes()
    budget = (capacity * 3) // 4            # headroom for compiler internal scratch
    tb = _pick_batch_tile(b, c, chw, out_p, f_item, w_item, o_item, budget)
    footprint = _per_step_vmem_bytes(tb, c, chw, out_p, f_item, w_item, o_item)
    vmem_limit = int(min(capacity, max(footprint + (8 << 20), 32 << 20)))

    flops = 2 * b * (chw * c + c * out_p)
    bytes_accessed = (b * chw * f_item + chw * c * 4 + c * out_p * w_item
                      + b * (out_p + c) * o_item)

    adapted_p, pooled = pl.pallas_call(
        _pool_proj_bn_relu_kernel,
        out_shape=(jax.ShapeDtypeStruct((b, out_p), out_dtype),
                   jax.ShapeDtypeStruct((b, c), out_dtype)),
        grid_spec=pltpu.PrefetchScalarGridSpec(
            num_scalar_prefetch=0,
            grid=(pl.cdiv(b, tb),),
            in_specs=[
                pl.BlockSpec((tb, chw), lambda i: (i, 0)),     # batch-tiled features
                pl.BlockSpec((chw, c), lambda i: (0, 0)),      # resident pooling matrix
                pl.BlockSpec((c, out_p), lambda i: (0, 0)),    # resident folded W
                pl.BlockSpec((1, out_p), lambda i: (0, 0)),    # resident folded b
            ],
            out_specs=(
                pl.BlockSpec((tb, out_p), lambda i: (i, 0)),
                pl.BlockSpec((tb, c), lambda i: (i, 0)),
            ),
        ),
        compiler_params=pltpu.CompilerParams(
            dimension_semantics=("parallel",),     # batch tiles shard across v7x TCs
            vmem_limit_bytes=vmem_limit),
        cost_estimate=pl.CostEstimate(flops=int(flops), transcendentals=0,
                                      bytes_accessed=int(bytes_accessed)),
    )(flat, pool_mat, w_folded, b_folded)

    if out_p != out_features and trim_padded_output:
        # NOTE: separate XLA copy; consumers that tolerate the zero-padded tail
        # should pass trim_padded_output=False to skip it.
        adapted_p = adapted_p[:, :out_features]
    return adapted_p, pooled


# ---------------------------------------------------------------------------
# Demo / correctness check
# ---------------------------------------------------------------------------
if __name__ == "__main__":
    key = jax.random.PRNGKey(0)
    # Simulated base_model output (the backbone itself is not translated):
    # actual_dim = C = 32, target_dim = 48 -> projection branch.
    B, C, H, W = 8, 32, 4, 4
    TARGET = 48
    EPS = 1e-5

    k_f, k_w, k_b, k_g, k_be, k_rm, k_rv = jax.random.split(key, 7)
    features = jax.random.normal(k_f, (B, C, H, W), dtype=jnp.float32)

    bound = 1.0 / math.sqrt(C)
    weight = jax.random.uniform(k_w, (TARGET, C), minval=-bound, maxval=bound,
                                dtype=jnp.float32)                 # nn.Linear.weight
    bias = jax.random.uniform(k_b, (TARGET,), minval=-bound, maxval=bound,
                              dtype=jnp.float32)                   # nn.Linear.bias
    gamma = 1.0 + 0.1 * jax.random.normal(k_g, (TARGET,), dtype=jnp.float32)
    beta = 0.1 * jax.random.normal(k_be, (TARGET,), dtype=jnp.float32)
    running_mean = 0.1 * jax.random.normal(k_rm, (TARGET,), dtype=jnp.float32)
    running_var = jnp.abs(1.0 + 0.1 * jax.random.normal(k_rv, (TARGET,), dtype=jnp.float32))

    # One-time parameter prep (BN fold + transpose + lane padding).
    proj_params = prepare_projection_params(weight, bias, gamma, beta,
                                            running_mean, running_var, eps=EPS)

    adapted, pooled = enhanced_feature_extractor_forward(features, proj_params)
    adapted, pooled = jax.block_until_ready((adapted, pooled))

    # Pure-JAX reference of the eval-mode forward.
    pooled_ref = features.reshape(B, C, -1).mean(axis=-1)
    y_ref = pooled_ref @ weight.T + bias
    y_ref = (y_ref - running_mean) / jnp.sqrt(running_var + EPS) * gamma + beta
    adapted_ref = jnp.maximum(y_ref, 0.0)

    assert adapted.shape == (B, TARGET) and pooled.shape == (B, C)
    assert jnp.allclose(pooled, pooled_ref, atol=2e-3, rtol=2e-3)
    assert jnp.allclose(adapted, adapted_ref, atol=2e-3, rtol=2e-3)

    # Identity-adapter branch (actual_dim == target_dim): torch module returns
    # the pooled features unchanged as adapted_features.
    adapted_id, pooled_id = enhanced_feature_extractor_forward(features, None)
    assert jnp.allclose(adapted_id, pooled_ref, atol=1e-6)
    assert jnp.allclose(pooled_id, pooled_ref, atol=1e-6)

    print("KERNEL_OK")
</pallas_src>

<mosaic_0001>
module attributes {stable_mosaic.version = 11 : i64} {
  func.func @_pool_proj_bn_relu_kernel(%arg0: i32, %arg1: memref<8x512xf32, #tpu.memory_space<vmem>>, %arg2: memref<512x32xf32, #tpu.memory_space<vmem>>, %arg3: memref<32x128xf32, #tpu.memory_space<vmem>>, %arg4: memref<1x128xf32, #tpu.memory_space<vmem>>, %arg5: memref<8x128xf32, #tpu.memory_space<vmem>>, %arg6: memref<8x32xf32, #tpu.memory_space<vmem>>) attributes {dimension_semantics = [#tpu.dimension_semantics<parallel>], iteration_bounds = array<i64: 1>, scalar_prefetch = 0 : i64, scratch_operands = 0 : i64, tpu.core_type = #tpu.core_type<tc>, window_params = [{transform_indices = @transform_0, window_bounds = array<i64: 8, 512>}, {pipeline_mode = #tpu.pipeline_mode<synchronous>, transform_indices = @transform_1, window_bounds = array<i64: 512, 32>}, {pipeline_mode = #tpu.pipeline_mode<synchronous>, transform_indices = @transform_2, window_bounds = array<i64: 32, 128>}, {pipeline_mode = #tpu.pipeline_mode<synchronous>, transform_indices = @transform_3, window_bounds = array<i64: 1, 128>}, {transform_indices = @transform_4, window_bounds = array<i64: 8, 128>}, {transform_indices = @transform_5, window_bounds = array<i64: 8, 32>}]} {
    %c0 = arith.constant 0 : index
    %c0_0 = arith.constant 0 : index
    %0 = vector.load %arg1[%c0, %c0_0] : memref<8x512xf32, #tpu.memory_space<vmem>>, vector<8x512xf32>
    %c0_1 = arith.constant 0 : index
    %c0_2 = arith.constant 0 : index
    %1 = vector.load %arg2[%c0_1, %c0_2] : memref<512x32xf32, #tpu.memory_space<vmem>>, vector<512x32xf32>
    %cst = arith.constant dense<0.000000e+00> : vector<8x32xf32>
    %2 = tpu.matmul %0, %1, %cst {dimension_numbers = #tpu.dot_dimension_numbers<[1], [0], [0], [1], [0, 0, 1, 1], [], []>} : vector<8x512xf32>, vector<512x32xf32>, vector<8x32xf32> -> vector<8x32xf32>
    %c0_3 = arith.constant 0 : index
    %c0_4 = arith.constant 0 : index
    %3 = vector.load %arg6[%c0_3, %c0_4] : memref<8x32xf32, #tpu.memory_space<vmem>>, vector<8x32xf32>
    tpu.vector_store %arg6[%c0_3, %c0_4], %2 {strides = array<i32>} : memref<8x32xf32, #tpu.memory_space<vmem>>, vector<8x32xf32>,
    %c0_5 = arith.constant 0 : index
    %c0_6 = arith.constant 0 : index
    %4 = vector.load %arg3[%c0_5, %c0_6] : memref<32x128xf32, #tpu.memory_space<vmem>>, vector<32x128xf32>
    %cst_7 = arith.constant dense<0.000000e+00> : vector<8x128xf32>
    %5 = tpu.matmul %2, %4, %cst_7 {dimension_numbers = #tpu.dot_dimension_numbers<[1], [0], [0], [1], [0, 0, 1, 1], [], []>} : vector<8x32xf32>, vector<32x128xf32>, vector<8x128xf32> -> vector<8x128xf32>
    %c0_8 = arith.constant 0 : index
    %c0_9 = arith.constant 0 : index
    %6 = vector.load %arg4[%c0_8, %c0_9] : memref<1x128xf32, #tpu.memory_space<vmem>>, vector<1x128xf32>
    %7 = vector.broadcast %6 : vector<1x128xf32> to vector<8x128xf32>
    %8 = arith.addf %5, %7 : vector<8x128xf32>
    %cst_10 = arith.constant 0.000000e+00 : f32
    %9 = vector.broadcast %cst_10 : f32 to vector<8x128xf32>
    %10 = arith.maximumf %8, %9 : vector<8x128xf32>
    %c0_11 = arith.constant 0 : index
    %c0_12 = arith.constant 0 : index
    %11 = vector.load %arg5[%c0_11, %c0_12] : memref<8x128xf32, #tpu.memory_space<vmem>>, vector<8x128xf32>
    tpu.vector_store %arg5[%c0_11, %c0_12], %10 {strides = array<i32>} : memref<8x128xf32, #tpu.memory_space<vmem>>, vector<8x128xf32>,
    return
  }
  func.func @transform_0(%arg0: i32) -> (i32, i32) {
    %c0_i32 = arith.constant 0 : i32
    %c0_i32_0 = arith.constant 0 : i32
    return %arg0, %c0_i32 : i32, i32
  }
  func.func @transform_1(%arg0: i32) -> (i32, i32) {
    %c0_i32 = arith.constant 0 : i32
    %c0_i32_0 = arith.constant 0 : i32
    %c0_i32_1 = arith.constant 0 : i32
    return %c0_i32, %c0_i32_0 : i32, i32
  }
  func.func @transform_2(%arg0: i32) -> (i32, i32) {
    %c0_i32 = arith.constant 0 : i32
    %c0_i32_0 = arith.constant 0 : i32
    %c0_i32_1 = arith.constant 0 : i32
    return %c0_i32, %c0_i32_0 : i32, i32
  }
  func.func @transform_3(%arg0: i32) -> (i32, i32) {
    %c0_i32 = arith.constant 0 : i32
    %c0_i32_0 = arith.constant 0 : i32
    %c0_i32_1 = arith.constant 0 : i32
    return %c0_i32, %c0_i32_0 : i32, i32
  }
  func.func @transform_4(%arg0: i32) -> (i32, i32) {
    %c0_i32 = arith.constant 0 : i32
    %c0_i32_0 = arith.constant 0 : i32
    return %arg0, %c0_i32 : i32, i32
  }
  func.func @transform_5(%arg0: i32) -> (i32, i32) {
    %c0_i32 = arith.constant 0 : i32
    %c0_i32_0 = arith.constant 0 : i32
    return %arg0, %c0_i32 : i32, i32
  }
}

</mosaic_0001>

<llo_original>
// kernel: tpu_custom_call.1
$region0: #{tpu_custom_call.1}
  #allocation0 [shape = 'u32[]', space=smem, size = 0x4, offset = 0x4, fixed_abs, tag = 'smem constant byte address 0x4 - core index']
  #allocation1 [shape = 'u32[72,128]{1,0:T(1,128)}', space=vmem, size = 0x9000, scoped, tag = 'internal scratch']
  %s0 = inlined_call_operand.vmem [shape: f32[8,512], index: 0, kind: input, shape index: {}]
  %s1 = inlined_call_operand.vmem [shape: f32[512,32], index: 1, kind: input, shape index: {}]
  %s2 = inlined_call_operand.vmem [shape: f32[32,128], index: 2, kind: input, shape index: {}]
  %s3 = inlined_call_operand.vmem [shape: f32[1,128], index: 3, kind: input, shape index: {}]
  %s4 = inlined_call_operand.hbm [shape: f32[8,128], index: 4, kind: output, shape index: {0}]
  %s5 = inlined_call_operand.hbm [shape: f32[8,32], index: 5, kind: output, shape index: {1}]
  %6 = xla_tuple %s4, %s5
  %s7 = sld [smem:[#allocation0]]
  $region34: #{tpu_custom_call.1} parent=0
    _
  %s9 = ssub.s32 1, %s7
  %s10 = scalar_select 0, %s9, %s7
  $region1: #{tpu_custom_call.1} parent=0
    #allocation2 [shape = 'u8[4096]{0}', space=vmem, size = 0x1000, scoped, tag = 'output window, operand 0, single buffered']
    #allocation3 [shape = 's32[1]{0}', space=sflag, size = 0x4, scoped, tag = 'scoped memory for tpu_custom_call.1']
    #allocation4 [shape = 'u8[4096]{0}', space=vmem, size = 0x1000, scoped, tag = 'output window, operand 1, single buffered']
    #allocation5 [shape = 's32[1]{0}', space=sflag, size = 0x4, scoped, tag = 'scoped memory for tpu_custom_call.1']
    %11 = vsyncpa [#allocation3], 0
    %12 = vsyncpa [#allocation5], 0
    // Predicated region
    $region2: #{tpu_custom_call.1} parent=1 // pred_check
      _
    $region3: #{tpu_custom_call.1} parent=1 // pred_check_branch
      %14 = sbr.rel (0) target = $region5
    $region4: #{tpu_custom_call.1} parent=1 // pred_region
      _
    $region5: #{tpu_custom_call.1} parent=1 // pred_fallthru
      _
    // Predicated region
    $region6: #{tpu_custom_call.1} parent=1 // pred_check
      _
    $region7: #{tpu_custom_call.1} parent=1 // pred_check_branch
      %16 = sbr.rel (0) target = $region9
    $region8: #{tpu_custom_call.1} parent=1 // pred_region
      _
    $region9: #{tpu_custom_call.1} parent=1 // pred_fallthru
      _
    // Predicated region
    $region10: #{tpu_custom_call.1} parent=1 // pred_check
      _
    $region11: #{tpu_custom_call.1} parent=1 // pred_check_branch
      %18 = sbr.rel (0) target = $region13
    $region12: #{tpu_custom_call.1} parent=1 // pred_region
      _
    $region13: #{tpu_custom_call.1} parent=1 // pred_fallthru
      _
    // Predicated region
    $region14: #{tpu_custom_call.1} parent=1 // pred_check
      _
    $region15: #{tpu_custom_call.1} parent=1 // pred_check_branch
      %20 = sbr.rel (0) target = $region17
    $region16: #{tpu_custom_call.1} parent=1 // pred_region
      _
    $region17: #{tpu_custom_call.1} parent=1 // pred_fallthru
      _
    %v21 = vld [vmem:[%s0] sm:$0xff]
    %v22 = vld [vmem:[%s0 + $0x8] sm:$0xff]
    %v23 = vld [vmem:[%s0 + $0x10] sm:$0xff]
    %v24 = vld [vmem:[%s0 + $0x18] sm:$0xff]
    %v25 = vld [vmem:[%s1] sm:$0xff]
    %v26 = vld [vmem:[%s1 + $0x8] sm:$0xff]
    %v27 = vld [vmem:[%s1 + $0x10] sm:$0xff]
    %v28 = vld [vmem:[%s1 + $0x18] sm:$0xff]
    %v29 = vld [vmem:[%s1 + $0x20] sm:$0xff]
    %v30 = vld [vmem:[%s1 + $0x28] sm:$0xff]
    %v31 = vld [vmem:[%s1 + $0x30] sm:$0xff]
    %v32 = vld [vmem:[%s1 + $0x38] sm:$0xff]
    %v33 = vld [vmem:[%s1 + $0x40] sm:$0xff]
    %v34 = vld [vmem:[%s1 + $0x48] sm:$0xff]
    %v35 = vld [vmem:[%s1 + $0x50] sm:$0xff]
    %v36 = vld [vmem:[%s1 + $0x58] sm:$0xff]
    %v37 = vld [vmem:[%s1 + $0x60] sm:$0xff]
    %v38 = vld [vmem:[%s1 + $0x68] sm:$0xff]
    %v39 = vld [vmem:[%s1 + $0x70] sm:$0xff]
    %v40 = vld [vmem:[%s1 + $0x78] sm:$0xff]
    %v41 = vld [vmem:[%s1 + $0x80] sm:$0xff]
    %v42 = vld [vmem:[%s1 + $0x88] sm:$0xff]
    %v43 = vld [vmem:[%s1 + $0x90] sm:$0xff]
    %v44 = vld [vmem:[%s1 + $0x98] sm:$0xff]
    %v45 = vld [vmem:[%s1 + $0xa0] sm:$0xff]
    %v46 = vld [vmem:[%s1 + $0xa8] sm:$0xff]
    %v47 = vld [vmem:[%s1 + $0xb0] sm:$0xff]
    %v48 = vld [vmem:[%s1 + $0xb8] sm:$0xff]
    %v49 = vld [vmem:[%s1 + $0xc0] sm:$0xff]
    %v50 = vld [vmem:[%s1 + $0xc8] sm:$0xff]
    %v51 = vld [vmem:[%s1 + $0xd0] sm:$0xff]
    %v52 = vld [vmem:[%s1 + $0xd8] sm:$0xff]
    %v53 = vld [vmem:[%s1 + $0xe0] sm:$0xff]
    %v54 = vld [vmem:[%s1 + $0xe8] sm:$0xff]
    %v55 = vld [vmem:[%s1 + $0xf0] sm:$0xff]
    %v56 = vld [vmem:[%s1 + $0xf8] sm:$0xff]
    %v57 = vld [vmem:[%s1 + $0x100] sm:$0xff]
    %v58 = vld [vmem:[%s1 + $0x108] sm:$0xff]
    %v59 = vld [vmem:[%s1 + $0x110] sm:$0xff]
    %v60 = vld [vmem:[%s1 + $0x118] sm:$0xff]
    %v61 = vld [vmem:[%s1 + $0x120] sm:$0xff]
    %v62 = vld [vmem:[%s1 + $0x128] sm:$0xff]
    %v63 = vld [vmem:[%s1 + $0x130] sm:$0xff]
    %v64 = vld [vmem:[%s1 + $0x138] sm:$0xff]
    %v65 = vld [vmem:[%s1 + $0x140] sm:$0xff]
    %v66 = vld [vmem:[%s1 + $0x148] sm:$0xff]
    %v67 = vld [vmem:[%s1 + $0x150] sm:$0xff]
    %v68 = vld [vmem:[%s1 + $0x158] sm:$0xff]
    %v69 = vld [vmem:[%s1 + $0x160] sm:$0xff]
    %v70 = vld [vmem:[%s1 + $0x168] sm:$0xff]
    %v71 = vld [vmem:[%s1 + $0x170] sm:$0xff]
    %v72 = vld [vmem:[%s1 + $0x178] sm:$0xff]
    %v73 = vld [vmem:[%s1 + $0x180] sm:$0xff]
    %v74 = vld [vmem:[%s1 + $0x188] sm:$0xff]
    %v75 = vld [vmem:[%s1 + $0x190] sm:$0xff]
    %v76 = vld [vmem:[%s1 + $0x198] sm:$0xff]
    %v77 = vld [vmem:[%s1 + $0x1a0] sm:$0xff]
    %v78 = vld [vmem:[%s1 + $0x1a8] sm:$0xff]
    %v79 = vld [vmem:[%s1 + $0x1b0] sm:$0xff]
    %v80 = vld [vmem:[%s1 + $0x1b8] sm:$0xff]
    %v81 = vld [vmem:[%s1 + $0x1c0] sm:$0xff]
    %v82 = vld [vmem:[%s1 + $0x1c8] sm:$0xff]
    %v83 = vld [vmem:[%s1 + $0x1d0] sm:$0xff]
    %v84 = vld [vmem:[%s1 + $0x1d8] sm:$0xff]
    %v85 = vld [vmem:[%s1 + $0x1e0] sm:$0xff]
    %v86 = vld [vmem:[%s1 + $0x1e8] sm:$0xff]
    %v87 = vld [vmem:[%s1 + $0x1f0] sm:$0xff]
    %v88 = vld [vmem:[%s1 + $0x1f8] sm:$0xff]
    %89 = vmatpush.msra.mxu0 %v40
    %90 = vmatpush.msra.mxu0 %v39
    %91 = vmatpush.msra.mxu0 %v38
    %92 = vmatpush.msra.mxu0 %v37
    %93 = vmatpush.msra.mxu0 %v36
    %94 = vmatpush.msra.mxu0 %v35
    %95 = vmatpush.msra.mxu0 %v34
    %96 = vmatpush.msra.mxu0 %v33
    %97 = vmatpush.msra.mxu0 %v32
    %98 = vmatpush.msra.mxu0 %v31
    %99 = vmatpush.msra.mxu0 %v30
    %100 = vmatpush.msra.mxu0 %v29
    %101 = vmatpush.msra.mxu0 %v28
    %102 = vmatpush.msra.mxu0 %v27
    %103 = vmatpush.msra.mxu0 %v26
    %104 = vmatpush.msra.mxu0 %v25
    %105 = vmatmul.f32.gmra.mxu0 %v21
    %v106 = vpop.f32.mrf.mxu0
    %v107 = vadd.f32 0.0, %v106
    %108 = vdwg.mxu0
    %109 = vmatpush.msra.mxu0 %v56
    %110 = vmatpush.msra.mxu0 %v55
    %111 = vmatpush.msra.mxu0 %v54
    %112 = vmatpush.msra.mxu0 %v53
    %113 = vmatpush.msra.mxu0 %v52
    %114 = vmatpush.msra.mxu0 %v51
    %115 = vmatpush.msra.mxu0 %v50
    %116 = vmatpush.msra.mxu0 %v49
    %117 = vmatpush.msra.mxu0 %v48
    %118 = vmatpush.msra.mxu0 %v47
    %119 = vmatpush.msra.mxu0 %v46
    %120 = vmatpush.msra.mxu0 %v45
    %121 = vmatpush.msra.mxu0 %v44
    %122 = vmatpush.msra.mxu0 %v43
    %123 = vmatpush.msra.mxu0 %v42
    %124 = vmatpush.msra.mxu0 %v41
    %125 = vmatmul.f32.gmra.mxu0 %v22
    %v126 = vpop.f32.mrf.mxu0
    %v127 = vadd.f32 %v107, %v126
    %128 = vdwg.mxu0
    %129 = vmatpush.msra.mxu0 %v72
    %130 = vmatpush.msra.mxu0 %v71
    %131 = vmatpush.msra.mxu0 %v70
    %132 = vmatpush.msra.mxu0 %v69
    %133 = vmatpush.msra.mxu0 %v68
    %134 = vmatpush.msra.mxu0 %v67
    %135 = vmatpush.msra.mxu0 %v66
    %136 = vmatpush.msra.mxu0 %v65
    %137 = vmatpush.msra.mxu0 %v64
    %138 = vmatpush.msra.mxu0 %v63
    %139 = vmatpush.msra.mxu0 %v62
    %140 = vmatpush.msra.mxu0 %v61
    %141 = vmatpush.msra.mxu0 %v60
    %142 = vmatpush.msra.mxu0 %v59
    %143 = vmatpush.msra.mxu0 %v58
    %144 = vmatpush.msra.mxu0 %v57
    %145 = vmatmul.f32.gmra.mxu0 %v23
    %v146 = vpop.f32.mrf.mxu0
    %v147 = vadd.f32 %v127, %v146
    %148 = vdwg.mxu0
    %149 = vmatpush.msra.mxu0 %v88
    %150 = vmatpush.msra.mxu0 %v87
    %151 = vmatpush.msra.mxu0 %v86
    %152 = vmatpush.msra.mxu0 %v85
    %153 = vmatpush.msra.mxu0 %v84
    %154 = vmatpush.msra.mxu0 %v83
    %155 = vmatpush.msra.mxu0 %v82
    %156 = vmatpush.msra.mxu0 %v81
    %157 = vmatpush.msra.mxu0 %v80
    %158 = vmatpush.msra.mxu0 %v79
    %159 = vmatpush.msra.mxu0 %v78
    %160 = vmatpush.msra.mxu0 %v77
    %161 = vmatpush.msra.mxu0 %v76
    %162 = vmatpush.msra.mxu0 %v75
    %163 = vmatpush.msra.mxu0 %v74
    %164 = vmatpush.msra.mxu0 %v73
    %165 = vmatmul.f32.gmra.mxu0 %v24
    %v166 = vpop.f32.mrf.mxu0
    %v167 = vadd.f32 %v147, %v166
    %168 = vdwg.mxu0
    %vm169 = vcmask 261120
    %170 = vst.msk [vmem:[#allocation4] sm:$0xff] %vm169, %v167
    %v171 = vld [vmem:[%s2] sm:$0xff]
    %v172 = vld [vmem:[%s2 + $0x8] sm:$0xff]
    %v173 = vld [vmem:[%s2 + $0x10] sm:$0xff]
    %v174 = vld [vmem:[%s2 + $0x18] sm:$0xff]
    %v175 = vld [vmem:[%s3] sm:$0x1]
    %v177 = vperm.slane %v175, 0
    %v180 = vsel %vm169, %v167, 0
    %182 = vmatpush.msra.mxu0 0.0
    %183 = vmatpush.msra.mxu0 0.0
    %184 = vmatpush.msra.mxu0 0.0
    %185 = vmatpush.msra.mxu0 0.0
    %186 = vmatpush.msra.mxu0 0.0
    %187 = vmatpush.msra.mxu0 0.0
    %188 = vmatpush.msra.mxu0 0.0
    %189 = vmatpush.msra.mxu0 0.0
    %190 = vmatpush.msra.mxu0 0.0
    %191 = vmatpush.msra.mxu0 0.0
    %192 = vmatpush.msra.mxu0 0.0
    %193 = vmatpush.msra.mxu0 0.0
    %194 = vmatpush.msra.mxu0 %v174
    %195 = vmatpush.msra.mxu0 %v173
    %196 = vmatpush.msra.mxu0 %v172
    %197 = vmatpush.msra.mxu0 %v171
    %198 = vmatmul.f32.gmra.mxu0 %v180
    %v199 = vpop.f32.mrf.mxu0
    %v200 = vadd.f32 %v177, %v199
    %201 = vdwg.mxu0
    %v202 = vmax.f32 %v200, 0.0
    %203 = vst [vmem:[#allocation2] sm:$0xff] %v202
    // Predicated region
    $region18: #{tpu_custom_call.1} parent=1 // pred_check
      _
    $region19: #{tpu_custom_call.1} parent=1 // pred_check_branch
      %205 = sbr.rel (0) target = $region21
    $region20: #{tpu_custom_call.1} parent=1 // pred_region
      %207 = vsyncadd [#allocation3], 0
      %s209 = sshll.u32 [#allocation2], 4
      %s210 = int_to_ptr.vmem [resolvable:$true] %s209
      %s211 = sshll.u32 %s4, 4
      %s212 = int_to_ptr.hbm [resolvable:$true] %s211
      %214 = dma.vmem_to_hbm [thread:$0]  %s210, 128, %s212, [#allocation3]
    $region21: #{tpu_custom_call.1} parent=1 // pred_fallthru
      _
    // Predicated region
    $region22: #{tpu_custom_call.1} parent=1 // pred_check
      _
    $region23: #{tpu_custom_call.1} parent=1 // pred_check_branch
      %216 = sbr.rel (0) target = $region25
    $region24: #{tpu_custom_call.1} parent=1 // pred_region
      %218 = vsyncadd [#allocation5], 0
      %s220 = sshll.u32 [#allocation4], 4
      %s221 = int_to_ptr.vmem [resolvable:$true] %s220
      %s222 = sshll.u32 %s5, 4
      %s223 = int_to_ptr.hbm [resolvable:$true] %s222
      %225 = dma.vmem_to_hbm [thread:$0]  %s221, 128, %s223, [#allocation5]
    $region25: #{tpu_custom_call.1} parent=1 // pred_fallthru
      _
    // Predicated region
    $region26: #{tpu_custom_call.1} parent=1 // pred_check
      _
    $region27: #{tpu_custom_call.1} parent=1 // pred_check_branch
      %227 = sbr.rel (0) target = $region29
    $region28: #{tpu_custom_call.1} parent=1 // pred_region
      %229 = dma.done [#allocation3], 128
    $region29: #{tpu_custom_call.1} parent=1 // pred_fallthru
      _
    // Predicated region
    $region30: #{tpu_custom_call.1} parent=1 // pred_check
      _
    $region31: #{tpu_custom_call.1} parent=1 // pred_check_branch
      %231 = sbr.rel (0) target = $region33
    $region32: #{tpu_custom_call.1} parent=1 // pred_region
      %233 = dma.done [#allocation5], 128
    $region33: #{tpu_custom_call.1} parent=1 // pred_fallthru
      _
    %234 = vsyncpa [#allocation3], 1
    %235 = vsyncpa [#allocation5], 1

</llo_original>
